<compile_context>
chip_gen: v7x
topology: tpu7x:2x2x1
jax: 0.10.0
libtpu: 0.0.40
codegen_flags: <defaults>
</compile_context>

<pallas_src>
import functools

import jax
import jax.numpy as jnp
from jax.experimental import pallas as pl
from jax.experimental.pallas import tpu as pltpu

LANES = 128  # vreg lane width


def _sublanes_for(dtype) -> int:
    """Native sublane packing: 8 rows for 4-byte, 16 for 2-byte, 32 for 1-byte."""
    itemsize = jnp.dtype(dtype).itemsize
    return max(8, 32 // max(1, itemsize))


def h_sigmoid_kernel(x_ref, o_ref):
    """Elementwise hard-sigmoid on one (row_tile, 128) block (VPU only)."""
    x = x_ref[...]
    y = jnp.clip(x + 3.0, 0.0, 6.0) * (1.0 / 6.0)
    o_ref[...] = y.astype(o_ref.dtype)


def _h_sigmoid_2d(x2d, row_tile):
    """Run the kernel over a lane-dense (rows, 128) slab."""
    rows, lanes = x2d.shape
    sublanes = _sublanes_for(x2d.dtype)

    if rows <= sublanes:
        # Block equals the full array dim (allowed even if not sublane-aligned).
        rt = rows
    else:
        rt = min(row_tile, rows)
        rt = max(sublanes, (rt // sublanes) * sublanes)  # sublane-aligned
        # Cap so the grid has >= 2 steps whenever possible: with
        # dimension_semantics=("parallel",) this lets v7x shard the grid across
        # its two TensorCores instead of idling one on a single-block launch.
        half = ((rows // 2) // sublanes) * sublanes
        if half >= sublanes:
            rt = min(rt, half)

    # cdiv grid: the final partial block (if any) is masked by Pallas — the tile
    # size is never shrunk to force even divisibility.
    grid = (pl.cdiv(rows, rt),)

    return pl.pallas_call(
        h_sigmoid_kernel,
        out_shape=jax.ShapeDtypeStruct((rows, lanes), x2d.dtype),
        grid_spec=pl.GridSpec(
            grid=grid,
            in_specs=[pl.BlockSpec((rt, lanes), lambda i: (i, 0))],
            out_specs=pl.BlockSpec((rt, lanes), lambda i: (i, 0)),
        ),
        compiler_params=pltpu.CompilerParams(
            dimension_semantics=("parallel",),
            # 2 x (in + out) double-buffered 4 MiB blocks = 16 MiB; raise the
            # scoped limit (v5e default is only 16 MiB) with headroom.  40 MiB
            # fits every generation's physical VMEM (>= 64 MiB).
            vmem_limit_bytes=40 * 1024 * 1024,
        ),
    )(x2d)


@functools.partial(jax.jit, static_argnames=("row_tile",))
def h_sigmoid(x, *, row_tile=8192):
    """Apply ReLU6(x + 3) / 6 elementwise via a lane-dense Pallas kernel.

    Works for any shape.  The bulk (a multiple of 128 elements) is processed as
    a (rows, 128) view with no padding; only a <128-element ragged tail (if any)
    is handled by a tiny jnp epilogue and concatenated back.
    """
    orig_shape = x.shape
    total = x.size
    flat = x.reshape(-1)

    main = (total // LANES) * LANES
    rem = total - main

    pieces = []
    if main > 0:
        # Contiguous prefix -> lane-dense 2D view, no pad, no trailing slice.
        x2d = flat[:main].reshape(main // LANES, LANES)
        pieces.append(_h_sigmoid_2d(x2d, row_tile).reshape(-1))
    if rem > 0:
        # <128-element tail: trivially cheap, keep it out of the kernel so the
        # bulk path never pays a full-array pad/slice pass.
        tail = flat[main:]
        pieces.append((jnp.clip(tail + 3.0, 0.0, 6.0) * (1.0 / 6.0)).astype(x.dtype))

    out_flat = pieces[0] if len(pieces) == 1 else jnp.concatenate(pieces)
    return out_flat.reshape(orig_shape)


def reference_h_sigmoid(x):
    """Pure-JAX reference mirroring the PyTorch forward: ReLU6(x + 3) / 6."""
    return jnp.clip(x + 3.0, 0.0, 6.0) / 6.0


if __name__ == "__main__":
    key = jax.random.PRNGKey(0)
    k1, k2, k3 = jax.random.split(key, 3)

    # 1) Size is a multiple of 128 (zero-copy, kernel-only path).
    N, C, H, W = 2, 4, 16, 16
    x = 4.0 * jax.random.normal(k1, (N, C, H, W), dtype=jnp.float32)
    out = jax.block_until_ready(h_sigmoid(x))
    ref = reference_h_sigmoid(x)
    assert out.shape == x.shape
    assert jnp.allclose(out, ref, atol=1e-6, rtol=1e-6), "mismatch (aligned path)"

    # 2) Tiny ragged input (<128 elements): tail-only path.
    x_odd = 4.0 * jax.random.normal(k2, (3, 5, 7), dtype=jnp.float32)
    out_odd = jax.block_until_ready(h_sigmoid(x_odd))
    assert out_odd.shape == x_odd.shape
    assert jnp.allclose(out_odd, reference_h_sigmoid(x_odd), atol=1e-6, rtol=1e-6), \
        "mismatch (tail-only path)"

    # 3) Bulk + ragged tail combined (kernel on prefix, jnp epilogue on tail).
    x_mix = 4.0 * jax.random.normal(k3, (5, 13, 17), dtype=jnp.float32)
    out_mix = jax.block_until_ready(h_sigmoid(x_mix))
    assert out_mix.shape == x_mix.shape
    assert jnp.allclose(out_mix, reference_h_sigmoid(x_mix), atol=1e-6, rtol=1e-6), \
        "mismatch (bulk+tail path)"

    print("KERNEL_OK")
</pallas_src>

<mosaic_0001>
module attributes {stable_mosaic.version = 11 : i64} {
  func.func @h_sigmoid_kernel(%arg0: i32, %arg1: memref<8x128xf32, #tpu.memory_space<vmem>>, %arg2: memref<8x128xf32, #tpu.memory_space<vmem>>) attributes {dimension_semantics = [#tpu.dimension_semantics<parallel>], iteration_bounds = array<i64: 2>, scalar_prefetch = 0 : i64, scratch_operands = 0 : i64, tpu.core_type = #tpu.core_type<tc>, window_params = [{transform_indices = @transform_0, window_bounds = array<i64: 8, 128>}, {transform_indices = @transform_1, window_bounds = array<i64: 8, 128>}]} {
    %c0 = arith.constant 0 : index
    %c0_0 = arith.constant 0 : index
    %0 = vector.load %arg1[%c0, %c0_0] : memref<8x128xf32, #tpu.memory_space<vmem>>, vector<8x128xf32>
    %cst = arith.constant 3.000000e+00 : f32
    %1 = vector.broadcast %cst : f32 to vector<8x128xf32>
    %2 = arith.addf %0, %1 : vector<8x128xf32>
    %cst_1 = arith.constant 0.000000e+00 : f32
    %cst_2 = arith.constant 6.000000e+00 : f32
    %3 = vector.broadcast %cst_1 : f32 to vector<8x128xf32>
    %4 = arith.maximumf %3, %2 : vector<8x128xf32>
    %5 = vector.broadcast %cst_2 : f32 to vector<8x128xf32>
    %6 = arith.minimumf %5, %4 : vector<8x128xf32>
    %cst_3 = arith.constant 0.166666672 : f32
    %7 = vector.broadcast %cst_3 : f32 to vector<8x128xf32>
    %8 = arith.mulf %6, %7 : vector<8x128xf32>
    %c0_4 = arith.constant 0 : index
    %c0_5 = arith.constant 0 : index
    %9 = vector.load %arg2[%c0_4, %c0_5] : memref<8x128xf32, #tpu.memory_space<vmem>>, vector<8x128xf32>
    tpu.vector_store %arg2[%c0_4, %c0_5], %8 {strides = array<i32>} : memref<8x128xf32, #tpu.memory_space<vmem>>, vector<8x128xf32>,
    return
  }
  func.func @transform_0(%arg0: i32) -> (i32, i32) {
    %c0_i32 = arith.constant 0 : i32
    %c0_i32_0 = arith.constant 0 : i32
    return %arg0, %c0_i32 : i32, i32
  }
  func.func @transform_1(%arg0: i32) -> (i32, i32) {
    %c0_i32 = arith.constant 0 : i32
    %c0_i32_0 = arith.constant 0 : i32
    return %arg0, %c0_i32 : i32, i32
  }
}

</mosaic_0001>

<llo_original>
// kernel: h_sigmoid.1
$region0: #{h_sigmoid.1}
  #allocation0 [shape = 'u32[]', space=smem, size = 0x4, offset = 0x4, fixed_abs, tag = 'smem constant byte address 0x4 - core index']
  #allocation1 [shape = 'u32[144,128]{1,0:T(1,128)}', space=vmem, size = 0x12000, scoped, tag = 'internal scratch']
  %s0 = inlined_call_operand.vmem [shape: f32[16,128], index: 0, kind: input, shape index: {}]
  %s1 = inlined_call_operand.vmem [shape: f32[16,128], index: 1, kind: output, shape index: {}]
  %s2 = sld [smem:[#allocation0]]
  $region37: #{h_sigmoid.1} parent=0
    _
  %s4 = ssub.s32 1, %s2
  %s5 = scalar_select 0, %s4, %s2
  loop: start=0, step=1, limit=4
  $region2: #{h_sigmoid.1} parent=0 // loop_pre_header
    _
  $region3: #{h_sigmoid.1} parent=0 // loop_header
    %s7 = sphi 0, %s11
    %p8 = scmp.ge.s32.totalorder %s7, 4
    %s17 = sphi 0, %s19
    %s20 = sphi 0, %s17
    %s21 = sphi 0, %s20
    %s37 = sphi 0, %s21
    %s43 = sphi 0, %s45
    %s46 = sphi 0, %s43
    %s47 = sphi 0, %s46
    %s63 = sphi 0, %s47
  $region4: #{h_sigmoid.1} parent=0 // loop_header_branch
    %10 = sbr.rel (%p8) target = $region8
  $region5: #{h_sigmoid.1} parent=0 // loop_body
    %s12 = ssub.s32 %s7, 1
    %s13 = ssub.s32 %s7, 2
    %s14 = sadd.s32 %s7, 1
    %s15 = ssub.s32 %s7, %s14
    %p16 = scmp.eq.s32.totalorder %s15, 0
    %s18 = sadd.s32 %s17, 1
    %s19 = scalar_select %p16, %s17, %s18
    %p22 = pneg %p16
    %p23 = scmp.eq.s32.totalorder %s7, 1
    %p24 = por %p22, %p23
    %p25 = scmp.ne.s32.totalorder %s17, %s20
    %p26 = scmp.eq.s32.totalorder %s7, 0
    %p27 = por %p25, %p26
    %p28 = scmp.ne.s32.totalorder %s17, %s20
    %p29 = scmp.eq.s32.totalorder %s12, 1
    %p30 = por %p28, %p29
    %p31 = scmp.ne.s32.totalorder %s20, %s21
    %p32 = scmp.eq.s32.totalorder %s12, 0
    %p33 = por %p31, %p32
    %p34 = scmp.ne.s32.totalorder %s20, %s21
    %p35 = scmp.eq.s32.totalorder %s13, 1
    %p36 = por %p34, %p35
    %p38 = scmp.ne.s32.totalorder %s21, %s37
    %p39 = scmp.eq.s32.totalorder %s13, 0
    %p40 = por %p38, %p39
    %s41 = ssub.s32 %s7, %s14
    %p42 = scmp.eq.s32.totalorder %s41, 0
    %s44 = sadd.s32 %s43, 1
    %s45 = scalar_select %p42, %s43, %s44
    %p48 = pneg %p42
    %p49 = scmp.eq.s32.totalorder %s7, 1
    %p50 = por %p48, %p49
    %p51 = scmp.ne.s32.totalorder %s43, %s46
    %p52 = scmp.eq.s32.totalorder %s7, 0
    %p53 = por %p51, %p52
    %p54 = scmp.ne.s32.totalorder %s43, %s46
    %p55 = scmp.eq.s32.totalorder %s12, 1
    %p56 = por %p54, %p55
    %p57 = scmp.ne.s32.totalorder %s46, %s47
    %p58 = scmp.eq.s32.totalorder %s12, 0
    %p59 = por %p57, %p58
    %p60 = scmp.ne.s32.totalorder %s46, %s47
    %p61 = scmp.eq.s32.totalorder %s13, 1
    %p62 = por %p60, %p61
    %p64 = scmp.ne.s32.totalorder %s47, %s63
    %p65 = scmp.eq.s32.totalorder %s13, 0
    %p66 = por %p64, %p65
    %p67 = scmp.le.s32.totalorder 1, %s7
    %p68 = scmp.lt.s32.totalorder %s7, 3
    %p69 = pnand %p67, %p68
    %p70 = pneg %p69
    // Predicated region
    $region9: #{h_sigmoid.1} parent=5 // pred_check
      _
    $region10: #{h_sigmoid.1} parent=5 // pred_check_branch
      %72 = sbr.rel (%p69) target = $region12
    $region11: #{h_sigmoid.1} parent=5 // pred_region
      %s73 = ssub.s32 %s7, 1
    $region12: #{h_sigmoid.1} parent=5 // pred_fallthru
      _
    %p74 = scmp.lt.s32.totalorder %s7, 2
    // Predicated region
    $region13: #{h_sigmoid.1} parent=5 // pred_check
      %p75 = pneg %p74
    $region14: #{h_sigmoid.1} parent=5 // pred_check_branch
      %77 = sbr.rel (%p75) target = $region16
    $region15: #{h_sigmoid.1} parent=5 // pred_region
      // Predicated region
      $region17: #{h_sigmoid.1} parent=15 // pred_check
        %p78 = pneg %p27
      $region18: #{h_sigmoid.1} parent=15 // pred_check_branch
        %80 = sbr.rel (%p78) target = $region20
      $region19: #{h_sigmoid.1} parent=15 // pred_region
        %p81 = scmp.lt.s32.totalorder %s7, 1
        %s82 = scalar_select %p81, %s7, 1
        %s83 = smul.addr %s82, 8
        %s84 = scalar_lea.vmem %s0, %s83
      $region20: #{h_sigmoid.1} parent=15 // pred_fallthru
        _
    $region16: #{h_sigmoid.1} parent=5 // pred_fallthru
      _
    %p85 = scmp.le.s32.totalorder 1, %s7
    %p86 = scmp.lt.s32.totalorder %s7, 3
    %p87 = pnand %p85, %p86
    %p88 = pneg %p87
    // Predicated region
    $region21: #{h_sigmoid.1} parent=5 // pred_check
      _
    $region22: #{h_sigmoid.1} parent=5 // pred_check_branch
      %90 = sbr.rel (%p87) target = $region24
    $region23: #{h_sigmoid.1} parent=5 // pred_region
      %s91 = ssub.s32 %s7, 1
      %p92 = scmp.lt.s32.totalorder %s12, 1
      %s93 = scalar_select %p92, %s12, 1
      %s94 = smul.addr %s93, 8
      %s95 = scalar_lea.vmem %s0, %s94
      %p96 = pneg %p33
      %p97 = pneg %p30
      %p98 = pneg %p59
      %p99 = pneg %p56
      %p100 = scmp.lt.s32.totalorder %s12, 1
      %s101 = scalar_select %p100, %s12, 1
      %s102 = smul.addr %s101, 8
      %s103 = scalar_lea.vmem %s1, %s102
      %p104 = scmp.lt.s32.totalorder %s12, 1
      %s105 = scalar_select %p104, %s12, 1
      %s106 = smul.addr %s105, 8
      %s107 = scalar_lea.vmem %s0, %s106
      %p108 = scmp.lt.s32.totalorder %s12, 1
      %s109 = scalar_select %p108, %s12, 1
      %s110 = smul.addr %s109, 8
      %s111 = scalar_lea.vmem %s1, %s110
      %v112 = vld [vmem:[%s107] sm:$0xff]
      %v113 = vadd.f32 %v112, 3.0
      %v114 = vmax.f32 %v113, 0.0
      %v115 = vmin.f32 %v114, 6.0
      %v116 = vmul.f32 %v115, 0.16666667
      %117 = vst [vmem:[%s111] sm:$0xff] %v116
      %p118 = scmp.lt.s32.totalorder %s12, 1
      %s119 = scalar_select %p118, %s12, 1
      %s120 = smul.addr %s119, 8
      %s121 = scalar_lea.vmem %s1, %s120
      // Predicated region
      $region25: #{h_sigmoid.1} parent=23 // pred_check
        %p122 = pneg %p56
      $region26: #{h_sigmoid.1} parent=23 // pred_check_branch
        %124 = sbr.rel (%p122) target = $region28
      $region27: #{h_sigmoid.1} parent=23 // pred_region
        _
      $region28: #{h_sigmoid.1} parent=23 // pred_fallthru
        _
    $region24: #{h_sigmoid.1} parent=5 // pred_fallthru
      _
    %p125 = scmp.le.s32.totalorder 2, %s7
    // Predicated region
    $region29: #{h_sigmoid.1} parent=5 // pred_check
      %p126 = pneg %p125
    $region30: #{h_sigmoid.1} parent=5 // pred_check_branch
      %128 = sbr.rel (%p126) target = $region32
    $region31: #{h_sigmoid.1} parent=5 // pred_region
      %s129 = ssub.s32 %s7, 2
      // Predicated region
      $region33: #{h_sigmoid.1} parent=31 // pred_check
        %p130 = pneg %p62
      $region34: #{h_sigmoid.1} parent=31 // pred_check_branch
        %132 = sbr.rel (%p130) target = $region36
      $region35: #{h_sigmoid.1} parent=31 // pred_region
        %p133 = scmp.lt.s32.totalorder %s13, 1
        %s134 = scalar_select %p133, %s13, 1
        %s135 = smul.addr %s134, 8
        %s136 = scalar_lea.vmem %s1, %s135
      $region36: #{h_sigmoid.1} parent=31 // pred_fallthru
        _
    $region32: #{h_sigmoid.1} parent=5 // pred_fallthru
      _
  $region6: #{h_sigmoid.1} parent=0 // loop_footer
    %s11 = sadd.s32 1, %s7
  $region7: #{h_sigmoid.1} parent=0 // loop_footer_branch
    %6 = sbr.rel target = $region3
  $region8: #{h_sigmoid.1} parent=0 // loop_exit
    _

</llo_original>
